<compile_context>
chip_gen: v7x
topology: tpu7x:2x2x1
jax: 0.10.0
libtpu: 0.0.40
codegen_flags: <defaults>
</compile_context>

<pallas_src>
import functools

import jax
import jax.numpy as jnp
from jax.experimental import pallas as pl
from jax.experimental.pallas import tpu as pltpu

IN_F = 16      # in_f
HIDDEN = 32    # hidden_node
DEPTH = 3      # depth
B_TILE = 256   # batch rows per grid step (multiple of 8; amortizes MXU fill/drain)


def modulator_kernel(z_ref, wx_ref, wz_ref, b_ref, out_ref):
    """All DEPTH Linear+ReLU layers for a (B_TILE, IN_F) tile of latents.

    z_ref : (Bt, IN_F)               latent rows
    wx_ref: (DEPTH-1, HIDDEN, HIDDEN)  hidden->hidden weights for layers 1..DEPTH-1
    wz_ref: (IN_F, DEPTH*HIDDEN)      packed z->hidden weights for all layers
    b_ref : (1, DEPTH*HIDDEN)         packed biases
    out_ref: (Bt, DEPTH*HIDDEN)       hiddens of all layers, lane-dense
    """
    z = z_ref[...]                                            # (Bt, IN_F)
    # One fused MXU op for the z-path of every layer (+ biases).
    zc = jnp.dot(z, wz_ref[...], preferred_element_type=jnp.float32) + b_ref[...]

    x = jnp.maximum(zc[:, :HIDDEN], 0.0)                      # layer 0 (no hidden input)
    hiddens = [x]
    for d in range(1, DEPTH):                                 # static unroll, DEPTH small
        h = jnp.dot(x, wx_ref[d - 1], preferred_element_type=jnp.float32)
        h = jnp.maximum(h + zc[:, d * HIDDEN:(d + 1) * HIDDEN], 0.0)
        hiddens.append(h)
        x = h
    out_ref[...] = jnp.concatenate(hiddens, axis=-1)          # single lane-dense store


def pack_modulator_params(weights, biases):
    """One-time packing of nn.Linear params (run at setup, NOT per forward).

    weights[d]: (HIDDEN, dim_d) with dim_0 = IN_F, dim_{d>0} = HIDDEN + IN_F
    biases[d] : (HIDDEN,)
    Returns (wx_stack, wz_packed, b_packed) with:
      wx_stack : (DEPTH-1, HIDDEN, HIDDEN)   -- x-part of layers 1..DEPTH-1, transposed
      wz_packed: (IN_F, DEPTH*HIDDEN)        -- z-part of all layers, transposed & packed
      b_packed : (1, DEPTH*HIDDEN)
    Exact identity:  cat([x, z]) @ W_d^T == x @ wx[d-1] + z @ wz[:, d*H:(d+1)*H].
    """
    wx_stack = jnp.stack([weights[d][:, :HIDDEN].T for d in range(1, DEPTH)])
    wz_cols = [weights[0].T] + [weights[d][:, HIDDEN:].T for d in range(1, DEPTH)]
    wz_packed = jnp.concatenate(wz_cols, axis=1)
    b_packed = jnp.concatenate(biases)[None, :]
    return (wx_stack.astype(jnp.float32),
            wz_packed.astype(jnp.float32),
            b_packed.astype(jnp.float32))


@functools.partial(jax.jit, static_argnames=("block_b",))
def _modulator_pallas(z_batch, wx, wz, b, *, block_b):
    """z_batch: (B, IN_F) with B a multiple of block_b.  Returns (B, DEPTH*HIDDEN)."""
    B = z_batch.shape[0]
    return pl.pallas_call(
        modulator_kernel,
        out_shape=jax.ShapeDtypeStruct((B, DEPTH * HIDDEN), jnp.float32),
        grid=(B // block_b,),
        in_specs=[
            pl.BlockSpec((block_b, IN_F), lambda i: (i, 0)),
            pl.BlockSpec((DEPTH - 1, HIDDEN, HIDDEN), lambda i: (0, 0, 0)),
            pl.BlockSpec((IN_F, DEPTH * HIDDEN), lambda i: (0, 0)),
            pl.BlockSpec((1, DEPTH * HIDDEN), lambda i: (0, 0)),
        ],
        out_specs=pl.BlockSpec((block_b, DEPTH * HIDDEN), lambda i: (i, 0)),
        compiler_params=pltpu.CompilerParams(
            dimension_semantics=("parallel",)),   # shards batch across v7x's 2 TCs
    )(z_batch, wx, wz, b)


def modulator_forward_batched(z_batch, packed, *, block_b=B_TILE):
    """z_batch: (B, IN_F).  Returns (B, DEPTH, HIDDEN) hiddens (vmapped module)."""
    wx, wz, b = packed
    B = z_batch.shape[0]
    bt = block_b if B >= block_b else max(8, -(-B // 8) * 8)   # sublane-aligned tile
    Bp = -(-B // bt) * bt
    zp = jnp.pad(z_batch.astype(jnp.float32), ((0, Bp - B), (0, 0)))
    out = _modulator_pallas(zp, wx, wz, b, block_b=bt)[:B]
    return out.reshape(B, DEPTH, HIDDEN)


def modulator_forward(z, packed):
    """Original module semantics: z (IN_F,) -> tuple of DEPTH (HIDDEN,) hidden vectors."""
    out = modulator_forward_batched(z[None, :], packed)[0]    # (DEPTH, HIDDEN)
    return tuple(out[d] for d in range(DEPTH))


def reference_forward(z, weights, biases):
    """Pure-JAX replica of the PyTorch forward (for verification)."""
    x = z
    hiddens = []
    for w, b in zip(weights, biases):
        x = jnp.maximum(x @ w.T + b, 0.0)
        hiddens.append(x)
        x = jnp.concatenate([x, z])
    return tuple(hiddens)


if __name__ == "__main__":
    key = jax.random.PRNGKey(0)

    # Deterministic synthetic parameters (same shapes as nn.Linear in __init__).
    weights, biases = [], []
    for d in range(DEPTH):
        dim = IN_F if d == 0 else HIDDEN + IN_F
        key, kw, kb = jax.random.split(key, 3)
        scale = 1.0 / jnp.sqrt(jnp.float32(dim))
        weights.append(jax.random.uniform(kw, (HIDDEN, dim), jnp.float32,
                                          minval=-scale, maxval=scale))
        biases.append(jax.random.uniform(kb, (HIDDEN,), jnp.float32,
                                         minval=-scale, maxval=scale))

    packed = pack_modulator_params(weights, biases)   # once, outside the hot path

    # --- Original module semantics: a single 1-D latent ---
    key, kz = jax.random.split(key)
    z = jax.random.normal(kz, (IN_F,), jnp.float32)
    hiddens = jax.block_until_ready(modulator_forward(z, packed))
    expected = reference_forward(z, weights, biases)
    for h, e in zip(hiddens, expected):
        assert h.shape == (HIDDEN,)
        assert jnp.allclose(h, e, atol=1e-4, rtol=1e-4), "single-z mismatch vs reference"

    # --- Batched path (what the performance review targets) ---
    key, kzb = jax.random.split(key)
    B = 512                                            # 2 grid steps of B_TILE=256
    z_batch = jax.random.normal(kzb, (B, IN_F), jnp.float32)
    out_b = jax.block_until_ready(modulator_forward_batched(z_batch, packed))
    assert out_b.shape == (B, DEPTH, HIDDEN)
    ref_b = jnp.stack(jax.vmap(lambda zz: jnp.stack(
        reference_forward(zz, weights, biases)))(z_batch))
    assert jnp.allclose(out_b, ref_b, atol=1e-4, rtol=1e-4), "batched mismatch vs reference"

    print("KERNEL_OK")
</pallas_src>

<mosaic_0001>
module attributes {stable_mosaic.version = 11 : i64} {
  func.func @modulator_kernel(%arg0: i32, %arg1: memref<8x16xf32, #tpu.memory_space<vmem>>, %arg2: memref<2x32x32xf32, #tpu.memory_space<vmem>>, %arg3: memref<16x96xf32, #tpu.memory_space<vmem>>, %arg4: memref<1x96xf32, #tpu.memory_space<vmem>>, %arg5: memref<8x96xf32, #tpu.memory_space<vmem>>) attributes {dimension_semantics = [#tpu.dimension_semantics<parallel>], iteration_bounds = array<i64: 1>, scalar_prefetch = 0 : i64, scratch_operands = 0 : i64, tpu.core_type = #tpu.core_type<tc>, window_params = [{transform_indices = @transform_0, window_bounds = array<i64: 8, 16>}, {pipeline_mode = #tpu.pipeline_mode<synchronous>, transform_indices = @transform_1, window_bounds = array<i64: 2, 32, 32>}, {pipeline_mode = #tpu.pipeline_mode<synchronous>, transform_indices = @transform_2, window_bounds = array<i64: 16, 96>}, {pipeline_mode = #tpu.pipeline_mode<synchronous>, transform_indices = @transform_3, window_bounds = array<i64: 1, 96>}, {transform_indices = @transform_4, window_bounds = array<i64: 8, 96>}]} {
    %c0 = arith.constant 0 : index
    %c0_0 = arith.constant 0 : index
    %0 = vector.load %arg1[%c0, %c0_0] : memref<8x16xf32, #tpu.memory_space<vmem>>, vector<8x16xf32>
    %c0_1 = arith.constant 0 : index
    %c0_2 = arith.constant 0 : index
    %1 = vector.load %arg3[%c0_1, %c0_2] : memref<16x96xf32, #tpu.memory_space<vmem>>, vector<16x96xf32>
    %cst = arith.constant dense<0.000000e+00> : vector<8x96xf32>
    %2 = tpu.matmul %0, %1, %cst {dimension_numbers = #tpu.dot_dimension_numbers<[1], [0], [0], [1], [0, 0, 1, 1], [], []>} : vector<8x16xf32>, vector<16x96xf32>, vector<8x96xf32> -> vector<8x96xf32>
    %c0_3 = arith.constant 0 : index
    %c0_4 = arith.constant 0 : index
    %3 = vector.load %arg4[%c0_3, %c0_4] : memref<1x96xf32, #tpu.memory_space<vmem>>, vector<1x96xf32>
    %4 = vector.broadcast %3 : vector<1x96xf32> to vector<8x96xf32>
    %5 = arith.addf %2, %4 : vector<8x96xf32>
    %6 = vector.extract_strided_slice %5 {offsets = [0, 0], sizes = [8, 32], strides = [1, 1]} : vector<8x96xf32> to vector<8x32xf32>
    %cst_5 = arith.constant 0.000000e+00 : f32
    %7 = vector.broadcast %cst_5 : f32 to vector<8x32xf32>
    %8 = arith.maximumf %6, %7 : vector<8x32xf32>
    %c0_6 = arith.constant 0 : index
    %c0_7 = arith.constant 0 : index
    %c0_8 = arith.constant 0 : index
    %9 = vector.load %arg2[%c0_6, %c0_7, %c0_8] : memref<2x32x32xf32, #tpu.memory_space<vmem>>, vector<1x32x32xf32>
    %10 = vector.shape_cast %9 : vector<1x32x32xf32> to vector<32x32xf32>
    %cst_9 = arith.constant dense<0.000000e+00> : vector<8x32xf32>
    %11 = tpu.matmul %8, %10, %cst_9 {dimension_numbers = #tpu.dot_dimension_numbers<[1], [0], [0], [1], [0, 0, 1, 1], [], []>} : vector<8x32xf32>, vector<32x32xf32>, vector<8x32xf32> -> vector<8x32xf32>
    %12 = vector.extract_strided_slice %5 {offsets = [0, 32], sizes = [8, 32], strides = [1, 1]} : vector<8x96xf32> to vector<8x32xf32>
    %13 = arith.addf %11, %12 : vector<8x32xf32>
    %cst_10 = arith.constant 0.000000e+00 : f32
    %14 = vector.broadcast %cst_10 : f32 to vector<8x32xf32>
    %15 = arith.maximumf %13, %14 : vector<8x32xf32>
    %c1 = arith.constant 1 : index
    %c0_11 = arith.constant 0 : index
    %c0_12 = arith.constant 0 : index
    %16 = vector.load %arg2[%c1, %c0_11, %c0_12] : memref<2x32x32xf32, #tpu.memory_space<vmem>>, vector<1x32x32xf32>
    %17 = vector.shape_cast %16 : vector<1x32x32xf32> to vector<32x32xf32>
    %cst_13 = arith.constant dense<0.000000e+00> : vector<8x32xf32>
    %18 = tpu.matmul %15, %17, %cst_13 {dimension_numbers = #tpu.dot_dimension_numbers<[1], [0], [0], [1], [0, 0, 1, 1], [], []>} : vector<8x32xf32>, vector<32x32xf32>, vector<8x32xf32> -> vector<8x32xf32>
    %19 = vector.extract_strided_slice %5 {offsets = [0, 64], sizes = [8, 32], strides = [1, 1]} : vector<8x96xf32> to vector<8x32xf32>
    %20 = arith.addf %18, %19 : vector<8x32xf32>
    %cst_14 = arith.constant 0.000000e+00 : f32
    %21 = vector.broadcast %cst_14 : f32 to vector<8x32xf32>
    %22 = arith.maximumf %20, %21 : vector<8x32xf32>
    %23 = tpu.concatenate %8, %15, %22 in 1 : vector<8x32xf32>, vector<8x32xf32>, vector<8x32xf32> -> vector<8x96xf32>
    %c0_15 = arith.constant 0 : index
    %c0_16 = arith.constant 0 : index
    %24 = vector.load %arg5[%c0_15, %c0_16] : memref<8x96xf32, #tpu.memory_space<vmem>>, vector<8x96xf32>
    tpu.vector_store %arg5[%c0_15, %c0_16], %23 {strides = array<i32>} : memref<8x96xf32, #tpu.memory_space<vmem>>, vector<8x96xf32>,
    return
  }
  func.func @transform_0(%arg0: i32) -> (i32, i32) {
    %c0_i32 = arith.constant 0 : i32
    %c0_i32_0 = arith.constant 0 : i32
    return %arg0, %c0_i32 : i32, i32
  }
  func.func @transform_1(%arg0: i32) -> (i32, i32, i32) {
    %c0_i32 = arith.constant 0 : i32
    %c0_i32_0 = arith.constant 0 : i32
    %c0_i32_1 = arith.constant 0 : i32
    %c0_i32_2 = arith.constant 0 : i32
    return %c0_i32, %c0_i32_0, %c0_i32_1 : i32, i32, i32
  }
  func.func @transform_2(%arg0: i32) -> (i32, i32) {
    %c0_i32 = arith.constant 0 : i32
    %c0_i32_0 = arith.constant 0 : i32
    %c0_i32_1 = arith.constant 0 : i32
    return %c0_i32, %c0_i32_0 : i32, i32
  }
  func.func @transform_3(%arg0: i32) -> (i32, i32) {
    %c0_i32 = arith.constant 0 : i32
    %c0_i32_0 = arith.constant 0 : i32
    %c0_i32_1 = arith.constant 0 : i32
    return %c0_i32, %c0_i32_0 : i32, i32
  }
  func.func @transform_4(%arg0: i32) -> (i32, i32) {
    %c0_i32 = arith.constant 0 : i32
    %c0_i32_0 = arith.constant 0 : i32
    return %arg0, %c0_i32 : i32, i32
  }
}

</mosaic_0001>

<llo_original>
// kernel: _modulator_pallas.1
$region0: #{_modulator_pallas.1}
  #allocation0 [shape = 'u32[]', space=smem, size = 0x4, offset = 0x4, fixed_abs, tag = 'smem constant byte address 0x4 - core index']
  #allocation1 [shape = 'u32[144,128]{1,0:T(1,128)}', space=vmem, size = 0x12000, scoped, tag = 'internal scratch']
  %s0 = inlined_call_operand.hbm [shape: f32[8,16], index: 0, kind: input, shape index: {}]
  %s1 = inlined_call_operand.hbm [shape: f32[2,32,32], index: 1, kind: input, shape index: {}]
  %s2 = inlined_call_operand.hbm [shape: f32[16,96], index: 2, kind: input, shape index: {}]
  %s3 = inlined_call_operand.vmem [shape: f32[1,96], index: 3, kind: input, shape index: {}]
  %s4 = inlined_call_operand.hbm [shape: f32[8,96], index: 4, kind: output, shape index: {}]
  %s5 = sld [smem:[#allocation0]]
  $region38: #{_modulator_pallas.1} parent=0
    _
  %s7 = ssub.s32 1, %s5
  %s8 = scalar_select 0, %s7, %s5
  $region1: #{_modulator_pallas.1} parent=0
    #allocation2 [shape = 'u8[4096]{0}', space=vmem, size = 0x1000, scoped, tag = 'input window, operand 0, single buffered']
    #allocation3 [shape = 's32[1]{0}', space=sflag, size = 0x4, scoped, tag = 'scoped memory for _modulator_pallas.1']
    #allocation4 [shape = 's32[1]{0}', space=sflag, size = 0x4, scoped, tag = 'scoped memory for _modulator_pallas.1']
    #allocation5 [shape = 'u8[32768]{0}', space=vmem, size = 0x8000, scoped, tag = 'input window, operand 1, single buffered']
    #allocation6 [shape = 's32[1]{0}', space=sflag, size = 0x4, scoped, tag = 'scoped memory for _modulator_pallas.1']
    #allocation7 [shape = 'u8[8192]{0}', space=vmem, size = 0x2000, scoped, tag = 'input window, operand 2, single buffered']
    #allocation8 [shape = 'u8[4096]{0}', space=vmem, size = 0x1000, scoped, tag = 'output window, operand 0, single buffered']
    %9 = vsyncpa [#allocation3], 0
    %10 = vsyncpa [#allocation6], 0
    %11 = vsyncpa [#allocation4], 0
    // Predicated region
    $region2: #{_modulator_pallas.1} parent=1 // pred_check
      _
    $region3: #{_modulator_pallas.1} parent=1 // pred_check_branch
      %13 = sbr.rel (0) target = $region5
    $region4: #{_modulator_pallas.1} parent=1 // pred_region
      %s15 = ssub.s32 128, 128
      %16 = vsyncadd [#allocation3], %s15
      %s18 = sshll.u32 [#allocation2], 4
      %s19 = int_to_ptr.vmem [resolvable:$true] %s18
      %21 = dma.hbm_to_vmem [thread:$0]  %s0, 128, %s19, [#allocation3]
    $region5: #{_modulator_pallas.1} parent=1 // pred_fallthru
      _
    // Predicated region
    $region6: #{_modulator_pallas.1} parent=1 // pred_check
      _
    $region7: #{_modulator_pallas.1} parent=1 // pred_check_branch
      %23 = sbr.rel (0) target = $region9
    $region8: #{_modulator_pallas.1} parent=1 // pred_region
      %s25 = ssub.s32 1024, 1024
      %26 = vsyncadd [#allocation6], %s25
      %s27 = sshll.u32 [#allocation5], 4
      %s28 = int_to_ptr.vmem [resolvable:$true] %s27
      %33 = dma.hbm_to_vmem [thread:$0]  %s1, 1024, %s28, [#allocation6], 128, 128, 8
    $region9: #{_modulator_pallas.1} parent=1 // pred_fallthru
      _
    // Predicated region
    $region10: #{_modulator_pallas.1} parent=1 // pred_check
      _
    $region11: #{_modulator_pallas.1} parent=1 // pred_check_branch
      %35 = sbr.rel (0) target = $region13
    $region12: #{_modulator_pallas.1} parent=1 // pred_region
      %s37 = ssub.s32 256, 256
      %38 = vsyncadd [#allocation6], %s37
      %s39 = sshll.u32 [#allocation7], 4
      %s40 = int_to_ptr.vmem [resolvable:$true] %s39
      %45 = dma.hbm_to_vmem [thread:$0]  %s2, 256, %s40, [#allocation6], 128, 128, 8
    $region13: #{_modulator_pallas.1} parent=1 // pred_fallthru
      _
    // Predicated region
    $region14: #{_modulator_pallas.1} parent=1 // pred_check
      _
    $region15: #{_modulator_pallas.1} parent=1 // pred_check_branch
      %47 = sbr.rel (0) target = $region17
    $region16: #{_modulator_pallas.1} parent=1 // pred_region
      _
    $region17: #{_modulator_pallas.1} parent=1 // pred_fallthru
      _
    // Predicated region
    $region18: #{_modulator_pallas.1} parent=1 // pred_check
      _
    $region19: #{_modulator_pallas.1} parent=1 // pred_check_branch
      %49 = sbr.rel (0) target = $region21
    $region20: #{_modulator_pallas.1} parent=1 // pred_region
      %50 = dma.done [#allocation3], 128
    $region21: #{_modulator_pallas.1} parent=1 // pred_fallthru
      _
    // Predicated region
    $region22: #{_modulator_pallas.1} parent=1 // pred_check
      _
    $region23: #{_modulator_pallas.1} parent=1 // pred_check_branch
      %52 = sbr.rel (0) target = $region25
    $region24: #{_modulator_pallas.1} parent=1 // pred_region
      %53 = dma.done [#allocation6], 1024
    $region25: #{_modulator_pallas.1} parent=1 // pred_fallthru
      _
    // Predicated region
    $region26: #{_modulator_pallas.1} parent=1 // pred_check
      _
    $region27: #{_modulator_pallas.1} parent=1 // pred_check_branch
      %55 = sbr.rel (0) target = $region29
    $region28: #{_modulator_pallas.1} parent=1 // pred_region
      %56 = dma.done [#allocation6], 256
    $region29: #{_modulator_pallas.1} parent=1 // pred_fallthru
      _
    %v57 = vld [vmem:[#allocation2] sm:$0xff]
    %v58 = vld [vmem:[#allocation7] sm:$0xff]
    %v59 = vld [vmem:[#allocation7 + $0x8] sm:$0xff]
    %v60 = vld [vmem:[%s3] sm:$0x1]
    %v62 = vlaneseq
    %v63 = vshrl.u32 %v62, 7
    %v64 = vsub.s32 0, %v63
    %v65 = vrot.slane %v60, %v64
    %vm67 = vcmask 130048
    %v69 = vsel %vm67, %v57, 0
    %71 = vmatprep.subr.mxu0 0.0
    %72 = vmatpush1.msra.mxu0 %v58
    %73 = vmatprep.subr.mxu0 0.0
    %74 = vmatpush1.msra.mxu0 %v59
    %75 = vmatprep.subr.mxu0 0.0
    %76 = vmatpush1.msra.mxu0 0.0
    %77 = vmatprep.subr.mxu0 0.0
    %78 = vmatpush1.msra.mxu0 0.0
    %79 = vmatprep.subr.mxu0 0.0
    %80 = vmatpush1.msra.mxu0 0.0
    %81 = vmatprep.subr.mxu0 0.0
    %82 = vmatpush1.msra.mxu0 0.0
    %83 = vmatprep.subr.mxu0 0.0
    %84 = vmatpush1.msra.mxu0 0.0
    %85 = vmatprep.subr.mxu0 0.0
    %86 = vmatpush1.msra.mxu0 0.0
    %87 = vmatprep.subr.mxu0 0.0
    %88 = vmatpush1.msra.mxu0 0.0
    %89 = vmatprep.subr.mxu0 0.0
    %90 = vmatpush1.msra.mxu0 0.0
    %91 = vmatprep.subr.mxu0 0.0
    %92 = vmatpush1.msra.mxu0 0.0
    %93 = vmatprep.subr.mxu0 0.0
    %94 = vmatpush1.msra.mxu0 0.0
    %95 = vmatprep.subr.mxu0 0.0
    %96 = vmatpush1.msra.mxu0 0.0
    %97 = vmatprep.subr.mxu0 0.0
    %98 = vmatpush1.msra.mxu0 0.0
    %99 = vmatprep.subr.mxu0 0.0
    %100 = vmatpush1.msra.mxu0 0.0
    %101 = vmatprep.subr.mxu0 0.0
    %102 = vmatpush1.msra.mxu0 0.0
    %103 = vmatprep.subr.mxu0 0.0
    %104 = vmatpush1.msra.mxu0 0.0
    %105 = vmatprep.subr.mxu0 0.0
    %106 = vmatpush1.msra.mxu0 0.0
    %107 = vmatprep.subr.mxu0 0.0
    %108 = vmatpush1.msra.mxu0 0.0
    %109 = vmatprep.subr.mxu0 0.0
    %110 = vmatpush1.msra.mxu0 0.0
    %111 = vmatprep.subr.mxu0 0.0
    %112 = vmatpush1.msra.mxu0 0.0
    %113 = vmatprep.subr.mxu0 0.0
    %114 = vmatpush1.msra.mxu0 0.0
    %115 = vmatprep.subr.mxu0 0.0
    %116 = vmatpush1.msra.mxu0 0.0
    %117 = vmatprep.subr.mxu0 0.0
    %118 = vmatpush1.msra.mxu0 0.0
    %119 = vmatprep.subr.mxu0 0.0
    %120 = vmatpush1.msra.mxu0 0.0
    %121 = vmatprep.subr.mxu0 0.0
    %122 = vmatpush1.msra.mxu0 0.0
    %123 = vmatprep.subr.mxu0 0.0
    %124 = vmatpush1.msra.mxu0 0.0
    %125 = vmatprep.subr.mxu0 0.0
    %126 = vmatpush1.msra.mxu0 0.0
    %127 = vmatprep.subr.mxu0 0.0
    %128 = vmatpush1.msra.mxu0 0.0
    %129 = vmatprep.subr.mxu0 0.0
    %130 = vmatpush1.msra.mxu0 0.0
    %131 = vmatprep.subr.mxu0 0.0
    %132 = vmatpush1.msra.mxu0 0.0
    %133 = vmatprep.subr.mxu0 0.0
    %134 = vmatpush1.msra.mxu0 0.0
    %135 = vmatprep.mubr.f32.mxu0 0.0
    %136 = vmatmul.mubr.f32.gmra.mrb[0].mxu0 %v69
    %v137 = vpop.f32.mrb[0].mxu0
    %v138 = vadd.f32 %v65, %v137
    %v139 = vpop.f32.mrb[0].mxu0
    %140 = vdwg.mxu0
    %v141 = vmax.f32 %v138, 0.0
    %v142 = vld [vmem:[#allocation5] sm:$0xff]
    %v143 = vld [vmem:[#allocation5 + $0x8] sm:$0xff]
    %v144 = vld [vmem:[#allocation5 + $0x10] sm:$0xff]
    %v145 = vld [vmem:[#allocation5 + $0x18] sm:$0xff]
    %147 = vrot.lane.b32.xlu0 %v138, 96
    %v148 = vpop.permute.xlu0 %147
    %vm150 = vcmask 261120
    %v152 = vsel %vm150, %v141, 0
    %154 = vmatprep.subr.mxu0 0.0
    %155 = vmatpush1.msra.mxu0 %v142
    %156 = vmatprep.subr.mxu0 0.0
    %157 = vmatpush1.msra.mxu0 %v143
    %158 = vmatprep.subr.mxu0 0.0
    %159 = vmatpush1.msra.mxu0 %v144
    %160 = vmatprep.subr.mxu0 0.0
    %161 = vmatpush1.msra.mxu0 %v145
    %162 = vmatprep.subr.mxu0 0.0
    %163 = vmatpush1.msra.mxu0 0.0
    %164 = vmatprep.subr.mxu0 0.0
    %165 = vmatpush1.msra.mxu0 0.0
    %166 = vmatprep.subr.mxu0 0.0
    %167 = vmatpush1.msra.mxu0 0.0
    %168 = vmatprep.subr.mxu0 0.0
    %169 = vmatpush1.msra.mxu0 0.0
    %170 = vmatprep.subr.mxu0 0.0
    %171 = vmatpush1.msra.mxu0 0.0
    %172 = vmatprep.subr.mxu0 0.0
    %173 = vmatpush1.msra.mxu0 0.0
    %174 = vmatprep.subr.mxu0 0.0
    %175 = vmatpush1.msra.mxu0 0.0
    %176 = vmatprep.subr.mxu0 0.0
    %177 = vmatpush1.msra.mxu0 0.0
    %178 = vmatprep.subr.mxu0 0.0
    %179 = vmatpush1.msra.mxu0 0.0
    %180 = vmatprep.subr.mxu0 0.0
    %181 = vmatpush1.msra.mxu0 0.0
    %182 = vmatprep.subr.mxu0 0.0
    %183 = vmatpush1.msra.mxu0 0.0
    %184 = vmatprep.subr.mxu0 0.0
    %185 = vmatpush1.msra.mxu0 0.0
    %186 = vmatprep.subr.mxu0 0.0
    %187 = vmatpush1.msra.mxu0 0.0
    %188 = vmatprep.subr.mxu0 0.0
    %189 = vmatpush1.msra.mxu0 0.0
    %190 = vmatprep.subr.mxu0 0.0
    %191 = vmatpush1.msra.mxu0 0.0
    %192 = vmatprep.subr.mxu0 0.0
    %193 = vmatpush1.msra.mxu0 0.0
    %194 = vmatprep.subr.mxu0 0.0
    %195 = vmatpush1.msra.mxu0 0.0
    %196 = vmatprep.subr.mxu0 0.0
    %197 = vmatpush1.msra.mxu0 0.0
    %198 = vmatprep.subr.mxu0 0.0
    %199 = vmatpush1.msra.mxu0 0.0
    %200 = vmatprep.subr.mxu0 0.0
    %201 = vmatpush1.msra.mxu0 0.0
    %202 = vmatprep.subr.mxu0 0.0
    %203 = vmatpush1.msra.mxu0 0.0
    %204 = vmatprep.subr.mxu0 0.0
    %205 = vmatpush1.msra.mxu0 0.0
    %206 = vmatprep.subr.mxu0 0.0
    %207 = vmatpush1.msra.mxu0 0.0
    %208 = vmatprep.subr.mxu0 0.0
    %209 = vmatpush1.msra.mxu0 0.0
    %210 = vmatprep.subr.mxu0 0.0
    %211 = vmatpush1.msra.mxu0 0.0
    %212 = vmatprep.subr.mxu0 0.0
    %213 = vmatpush1.msra.mxu0 0.0
    %214 = vmatprep.subr.mxu0 0.0
    %215 = vmatpush1.msra.mxu0 0.0
    %216 = vmatprep.subr.mxu0 0.0
    %217 = vmatpush1.msra.mxu0 0.0
    %218 = vmatprep.mubr.f32.mxu0 0.0
    %219 = vmatmul.mubr.f32.gmra.mrb[0].mxu0 %v152
    %v220 = vpop.f32.mrb[0].mxu0
    %v221 = vadd.f32 %v148, %v220
    %v222 = vpop.f32.mrb[0].mxu0
    %223 = vdwg.mxu0
    %v224 = vmax.f32 %v221, 0.0
    %s225 = scalar_lea.vmem [#allocation5], 32
    %v226 = vld [vmem:[%s225] sm:$0xff]
    %v227 = vld [vmem:[%s225 + $0x8] sm:$0xff]
    %v228 = vld [vmem:[%s225 + $0x10] sm:$0xff]
    %v229 = vld [vmem:[%s225 + $0x18] sm:$0xff]
    %230 = vrot.lane.b32.xlu0 %v138, 64
    %v231 = vpop.permute.xlu0 %230
    %v234 = vsel %vm150, %v224, 0
    %236 = vmatprep.subr.mxu0 0.0
    %237 = vmatpush1.msra.mxu0 %v226
    %238 = vmatprep.subr.mxu0 0.0
    %239 = vmatpush1.msra.mxu0 %v227
    %240 = vmatprep.subr.mxu0 0.0
    %241 = vmatpush1.msra.mxu0 %v228
    %242 = vmatprep.subr.mxu0 0.0
    %243 = vmatpush1.msra.mxu0 %v229
    %244 = vmatprep.subr.mxu0 0.0
    %245 = vmatpush1.msra.mxu0 0.0
    %246 = vmatprep.subr.mxu0 0.0
    %247 = vmatpush1.msra.mxu0 0.0
    %248 = vmatprep.subr.mxu0 0.0
    %249 = vmatpush1.msra.mxu0 0.0
    %250 = vmatprep.subr.mxu0 0.0
    %251 = vmatpush1.msra.mxu0 0.0
    %252 = vmatprep.subr.mxu0 0.0
    %253 = vmatpush1.msra.mxu0 0.0
    %254 = vmatprep.subr.mxu0 0.0
    %255 = vmatpush1.msra.mxu0 0.0
    %256 = vmatprep.subr.mxu0 0.0
    %257 = vmatpush1.msra.mxu0 0.0
    %258 = vmatprep.subr.mxu0 0.0
    %259 = vmatpush1.msra.mxu0 0.0
    %260 = vmatprep.subr.mxu0 0.0
    %261 = vmatpush1.msra.mxu0 0.0
    %262 = vmatprep.subr.mxu0 0.0
    %263 = vmatpush1.msra.mxu0 0.0
    %264 = vmatprep.subr.mxu0 0.0
    %265 = vmatpush1.msra.mxu0 0.0
    %266 = vmatprep.subr.mxu0 0.0
    %267 = vmatpush1.msra.mxu0 0.0
    %268 = vmatprep.subr.mxu0 0.0
    %269 = vmatpush1.msra.mxu0 0.0
    %270 = vmatprep.subr.mxu0 0.0
    %271 = vmatpush1.msra.mxu0 0.0
    %272 = vmatprep.subr.mxu0 0.0
    %273 = vmatpush1.msra.mxu0 0.0
    %274 = vmatprep.subr.mxu0 0.0
    %275 = vmatpush1.msra.mxu0 0.0
    %276 = vmatprep.subr.mxu0 0.0
    %277 = vmatpush1.msra.mxu0 0.0
    %278 = vmatprep.subr.mxu0 0.0
    %279 = vmatpush1.msra.mxu0 0.0
    %280 = vmatprep.subr.mxu0 0.0
    %281 = vmatpush1.msra.mxu0 0.0
    %282 = vmatprep.subr.mxu0 0.0
    %283 = vmatpush1.msra.mxu0 0.0
    %284 = vmatprep.subr.mxu0 0.0
    %285 = vmatpush1.msra.mxu0 0.0
    %286 = vmatprep.subr.mxu0 0.0
    %287 = vmatpush1.msra.mxu0 0.0
    %288 = vmatprep.subr.mxu0 0.0
    %289 = vmatpush1.msra.mxu0 0.0
    %290 = vmatprep.subr.mxu0 0.0
    %291 = vmatpush1.msra.mxu0 0.0
    %292 = vmatprep.subr.mxu0 0.0
    %293 = vmatpush1.msra.mxu0 0.0
    %294 = vmatprep.subr.mxu0 0.0
    %295 = vmatpush1.msra.mxu0 0.0
    %296 = vmatprep.subr.mxu0 0.0
    %297 = vmatpush1.msra.mxu0 0.0
    %298 = vmatprep.subr.mxu0 0.0
    %299 = vmatpush1.msra.mxu0 0.0
    %300 = vmatprep.mubr.f32.mxu0 0.0
    %301 = vmatmul.mubr.f32.gmra.mrb[0].mxu0 %v234
    %v302 = vpop.f32.mrb[0].mxu0
    %v303 = vadd.f32 %v231, %v302
    %v304 = vpop.f32.mrb[0].mxu0
    %305 = vdwg.mxu0
    %v306 = vmax.f32 %v303, 0.0
    %307 = vrot.lane.b32.xlu0 %v224, 32
    %v308 = vpop.permute.xlu0 %307
    %311 = vrot.lane.b32.xlu0 %v306, 64
    %v312 = vpop.permute.xlu0 %311
    %v314 = vsel %vm150, %v141, %v308
    %vm315 = vcmask 523264
    %v316 = vsel %vm315, %v314, %v312
    %vm317 = vcmask 785408
    %318 = vst.msk [vmem:[#allocation8] sm:$0xff] %vm317, %v316
    // Predicated region
    $region30: #{_modulator_pallas.1} parent=1 // pred_check
      _
    $region31: #{_modulator_pallas.1} parent=1 // pred_check_branch
      %320 = sbr.rel (0) target = $region33
    $region32: #{_modulator_pallas.1} parent=1 // pred_region
      %s322 = ssub.s32 128, 128
      %323 = vsyncadd [#allocation4], %s322
      %s325 = sshll.u32 [#allocation8], 4
      %s326 = int_to_ptr.vmem [resolvable:$true] %s325
      %328 = dma.vmem_to_hbm [thread:$0]  %s326, 128, %s4, [#allocation4]
    $region33: #{_modulator_pallas.1} parent=1 // pred_fallthru
      _
    // Predicated region
    $region34: #{_modulator_pallas.1} parent=1 // pred_check
      _
    $region35: #{_modulator_pallas.1} parent=1 // pred_check_branch
      %330 = sbr.rel (0) target = $region37
    $region36: #{_modulator_pallas.1} parent=1 // pred_region
      %331 = dma.done [#allocation4], 128
    $region37: #{_modulator_pallas.1} parent=1 // pred_fallthru
      _
    %332 = vsyncpa [#allocation3], 1
    %333 = vsyncpa [#allocation6], 1
    %334 = vsyncpa [#allocation4], 1

</llo_original>
